<compile_context>
chip_gen: v7x
topology: tpu7x:2x2x1
jax: 0.10.0
libtpu: 0.0.40
codegen_flags: <defaults>
</compile_context>

<pallas_src>
import jax
import jax.numpy as jnp
from jax.experimental import pallas as pl
from jax.experimental.pallas import tpu as pltpu

H_DIM = 32      # h_dim of the Jump module
D64 = 64        # 2**6
D32 = 32        # 2**5


# --------------------------------------------------------------------------
# Kernel
# --------------------------------------------------------------------------
def jump_kernel(t_ref, x_ref,
                w1_ref, b1_ref, w2_ref, b2_ref,
                wt1_ref, bt1_ref,
                w3p_ref, wt2p_ref, bf_ref,
                out_ref):
    wdt = w1_ref.dtype  # f32 or bf16 (weights); accumulation is always f32.

    # ---- x branch: Linear(h,64) -> sigmoid -> Linear(64,64) -> sigmoid
    h = jnp.dot(x_ref[...].astype(wdt), w1_ref[...],
                preferred_element_type=jnp.float32) + b1_ref[...]
    h = jax.nn.sigmoid(h)
    h = jnp.dot(h.astype(wdt), w2_ref[...],
                preferred_element_type=jnp.float32) + b2_ref[...]
    h = jax.nn.sigmoid(h)

    # ---- t branch: Linear(3,32) -> sigmoid, done as 3 VPU broadcast FMAs
    # (a K=3 MXU matmul is ~2% utilization; the VALU slots are otherwise idle)
    t = t_ref[...].astype(jnp.float32)          # (bb, 3)
    wt1 = wt1_ref[...].astype(jnp.float32)      # (3, 32)
    pre = (bt1_ref[...]
           + t[:, 0:1] * wt1[0:1, :]
           + t[:, 1:2] * wt1[1:2, :]
           + t[:, 2:3] * wt1[2:3, :])           # (bb, 32)
    ht = jax.nn.sigmoid(pre)

    # ---- fused projection (w3, wt2, wp and their biases folded offline)
    out = (jnp.dot(h.astype(wdt), w3p_ref[...], preferred_element_type=jnp.float32)
           + jnp.dot(ht.astype(wdt), wt2p_ref[...], preferred_element_type=jnp.float32)
           + bf_ref[...])
    out_ref[...] = out.astype(out_ref.dtype)


# --------------------------------------------------------------------------
# Wrapper
# --------------------------------------------------------------------------
def _pick_block_b(B, max_block=2048):
    """Pick the batch tile: as large as possible (amortize per-grid-step
    overhead, keep the MXU fed), a multiple of 8 sublanes when B allows, and
    >= 2 grid steps when possible so both v7x TensorCores are used."""
    if B <= 8:
        return B
    best = None
    d = 8
    cap = min(B, max_block)
    while d <= cap:
        if B % d == 0:
            best = d
        d += 8
    if best is None:
        return B                              # awkward B: single full block
    if best == B and (B // 2) % 8 == 0:
        best = B // 2                         # prefer 2 parallel grid steps
    return best


def fold_params(params, param_dtype=jnp.float32):
    """Offline parameter prep: fold the bias-free linear tails into the
    projection (algebraically identical) and optionally cast weights to bf16
    (recommended on v6e/v7x). Biases stay f32 (added after f32 accumulation).
    Do this once at parameter-load time, not per forward call."""
    (w1, b1, w2, b2, w3, b3, wt1, bt1, wt2, bt2, wp, bp) = params
    wpt, wpx = wp[:D64], wp[D64:]
    w3p = w3 @ wpx                             # (64, h_dim)
    wt2p = wt2 @ wpt                           # (32, h_dim)
    bf = b3 @ wpx + bt2 @ wpt + bp             # (1, h_dim)
    c = lambda a: a.astype(param_dtype)
    f = lambda a: a.astype(jnp.float32)
    return (c(w1), f(b1), c(w2), f(b2), c(wt1), f(bt1), c(w3p), c(wt2p), f(bf))


def jump_forward(t, x, folded_params, *, block_b=None, max_block=2048):
    B, h_dim = x.shape
    if block_b is None:
        block_b = _pick_block_b(B, max_block)
    assert B % block_b == 0, (B, block_b)
    grid = (B // block_b,)

    (w1, b1, w2, b2, wt1, bt1, w3p, wt2p, bf) = folded_params

    def full(a):
        # whole (small) parameter array, same block every grid step
        return pl.BlockSpec(a.shape, lambda i: (0, 0))

    in_specs = [
        pl.BlockSpec((block_b, t.shape[1]), lambda i: (i, 0)),   # t
        pl.BlockSpec((block_b, h_dim), lambda i: (i, 0)),        # x
        full(w1), full(b1), full(w2), full(b2),
        full(wt1), full(bt1),
        full(w3p), full(wt2p), full(bf),
    ]
    out_spec = pl.BlockSpec((block_b, h_dim), lambda i: (i, 0))

    return pl.pallas_call(
        jump_kernel,
        out_shape=jax.ShapeDtypeStruct((B, h_dim), jnp.float32),
        grid_spec=pltpu.PrefetchScalarGridSpec(
            num_scalar_prefetch=0,
            grid=grid,
            in_specs=in_specs,
            out_specs=out_spec,
        ),
        compiler_params=pltpu.CompilerParams(
            dimension_semantics=("parallel",)),
    )(t, x, w1, b1, w2, b2, wt1, bt1, w3p, wt2p, bf)


# --------------------------------------------------------------------------
# Parameters & pure-JAX reference (unfused, mirrors the torch module exactly)
# --------------------------------------------------------------------------
def init_params(key, h_dim):
    """Deterministic synthetic parameters. Weights (in, out); biases (1, out)."""
    ks = jax.random.split(key, 6)

    def lin(k, fan_in, fan_out):
        kw, kb = jax.random.split(k)
        s = 1.0 / jnp.sqrt(fan_in)
        w = jax.random.uniform(kw, (fan_in, fan_out), jnp.float32, -s, s)
        b = jax.random.uniform(kb, (1, fan_out), jnp.float32, -s, s)
        return w, b

    w1, b1 = lin(ks[0], h_dim, D64)
    w2, b2 = lin(ks[1], D64, D64)
    w3, b3 = lin(ks[2], D64, D64)
    wt1, bt1 = lin(ks[3], 3, D32)
    wt2, bt2 = lin(ks[4], D32, D64)
    wp, bp = lin(ks[5], 2 * D64, h_dim)        # proj: Linear(128, h_dim)
    return (w1, b1, w2, b2, w3, b3, wt1, bt1, wt2, bt2, wp, bp)


def jump_reference(t, x, params):
    (w1, b1, w2, b2, w3, b3, wt1, bt1, wt2, bt2, wp, bp) = params
    h = jax.nn.sigmoid(x @ w1 + b1)
    h = jax.nn.sigmoid(h @ w2 + b2)
    out_x = h @ w3 + b3
    ht = jax.nn.sigmoid(t @ wt1 + bt1)
    out_t = ht @ wt2 + bt2
    cat = jnp.concatenate([out_t, out_x], axis=1)
    return cat @ wp + bp


# --------------------------------------------------------------------------
if __name__ == "__main__":
    key = jax.random.PRNGKey(0)
    kp, kt, kx = jax.random.split(key, 3)

    B = 16
    params = init_params(kp, H_DIM)
    t = jax.random.normal(kt, (B, 3), jnp.float32)
    x = jax.random.normal(kx, (B, H_DIM), jnp.float32)

    ref = jump_reference(t, x, params)

    # f32 path (default; exact up to accumulation order of the folding)
    folded_f32 = fold_params(params, jnp.float32)
    out = jax.block_until_ready(jump_forward(t, x, folded_f32))
    assert out.shape == (B, H_DIM)
    assert jnp.allclose(out, ref, atol=1e-4, rtol=1e-4), "f32 mismatch vs reference"

    # bf16-weight path (recommended on v6e/v7x: bf16 MXU, f32 accumulation)
    folded_bf16 = fold_params(params, jnp.bfloat16)
    out_bf16 = jax.block_until_ready(jump_forward(t, x, folded_bf16))
    assert out_bf16.shape == (B, H_DIM)
    assert jnp.allclose(out_bf16, ref, atol=5e-2, rtol=5e-2), "bf16 mismatch vs reference"

    print("KERNEL_OK")
</pallas_src>

<mosaic_0001>
module attributes {stable_mosaic.version = 11 : i64} {
  func.func @jump_kernel(%arg0: i32, %arg1: memref<8x3xf32, #tpu.memory_space<vmem>>, %arg2: memref<8x32xf32, #tpu.memory_space<vmem>>, %arg3: memref<32x64xf32, #tpu.memory_space<vmem>>, %arg4: memref<1x64xf32, #tpu.memory_space<vmem>>, %arg5: memref<64x64xf32, #tpu.memory_space<vmem>>, %arg6: memref<1x64xf32, #tpu.memory_space<vmem>>, %arg7: memref<3x32xf32, #tpu.memory_space<vmem>>, %arg8: memref<1x32xf32, #tpu.memory_space<vmem>>, %arg9: memref<64x32xf32, #tpu.memory_space<vmem>>, %arg10: memref<32x32xf32, #tpu.memory_space<vmem>>, %arg11: memref<1x32xf32, #tpu.memory_space<vmem>>, %arg12: memref<8x32xf32, #tpu.memory_space<vmem>>) attributes {dimension_semantics = [#tpu.dimension_semantics<parallel>], iteration_bounds = array<i64: 2>, scalar_prefetch = 0 : i64, scratch_operands = 0 : i64, tpu.core_type = #tpu.core_type<tc>, window_params = [{transform_indices = @transform_0, window_bounds = array<i64: 8, 3>}, {transform_indices = @transform_1, window_bounds = array<i64: 8, 32>}, {pipeline_mode = #tpu.pipeline_mode<synchronous>, transform_indices = @transform_2, window_bounds = array<i64: 32, 64>}, {pipeline_mode = #tpu.pipeline_mode<synchronous>, transform_indices = @transform_3, window_bounds = array<i64: 1, 64>}, {pipeline_mode = #tpu.pipeline_mode<synchronous>, transform_indices = @transform_4, window_bounds = array<i64: 64, 64>}, {pipeline_mode = #tpu.pipeline_mode<synchronous>, transform_indices = @transform_5, window_bounds = array<i64: 1, 64>}, {pipeline_mode = #tpu.pipeline_mode<synchronous>, transform_indices = @transform_6, window_bounds = array<i64: 3, 32>}, {pipeline_mode = #tpu.pipeline_mode<synchronous>, transform_indices = @transform_7, window_bounds = array<i64: 1, 32>}, {pipeline_mode = #tpu.pipeline_mode<synchronous>, transform_indices = @transform_8, window_bounds = array<i64: 64, 32>}, {pipeline_mode = #tpu.pipeline_mode<synchronous>, transform_indices = @transform_9, window_bounds = array<i64: 32, 32>}, {pipeline_mode = #tpu.pipeline_mode<synchronous>, transform_indices = @transform_10, window_bounds = array<i64: 1, 32>}, {transform_indices = @transform_11, window_bounds = array<i64: 8, 32>}]} {
    %c0 = arith.constant 0 : index
    %c0_0 = arith.constant 0 : index
    %0 = vector.load %arg2[%c0, %c0_0] : memref<8x32xf32, #tpu.memory_space<vmem>>, vector<8x32xf32>
    %c0_1 = arith.constant 0 : index
    %c0_2 = arith.constant 0 : index
    %1 = vector.load %arg3[%c0_1, %c0_2] : memref<32x64xf32, #tpu.memory_space<vmem>>, vector<32x64xf32>
    %cst = arith.constant dense<0.000000e+00> : vector<8x64xf32>
    %2 = tpu.matmul %0, %1, %cst {dimension_numbers = #tpu.dot_dimension_numbers<[1], [0], [0], [1], [0, 0, 1, 1], [], []>} : vector<8x32xf32>, vector<32x64xf32>, vector<8x64xf32> -> vector<8x64xf32>
    %c0_3 = arith.constant 0 : index
    %c0_4 = arith.constant 0 : index
    %3 = vector.load %arg4[%c0_3, %c0_4] : memref<1x64xf32, #tpu.memory_space<vmem>>, vector<1x64xf32>
    %4 = vector.broadcast %3 : vector<1x64xf32> to vector<8x64xf32>
    %5 = arith.addf %2, %4 : vector<8x64xf32>
    %6 = arith.negf %5 : vector<8x64xf32>
    %7 = math.exp %6 : vector<8x64xf32>
    %cst_5 = arith.constant 1.000000e+00 : f32
    %8 = vector.broadcast %cst_5 : f32 to vector<8x64xf32>
    %9 = arith.addf %8, %7 : vector<8x64xf32>
    %10 = arith.divf %8, %9 : vector<8x64xf32>
    %c0_6 = arith.constant 0 : index
    %c0_7 = arith.constant 0 : index
    %11 = vector.load %arg5[%c0_6, %c0_7] : memref<64x64xf32, #tpu.memory_space<vmem>>, vector<64x64xf32>
    %cst_8 = arith.constant dense<0.000000e+00> : vector<8x64xf32>
    %12 = tpu.matmul %10, %11, %cst_8 {dimension_numbers = #tpu.dot_dimension_numbers<[1], [0], [0], [1], [0, 0, 1, 1], [], []>} : vector<8x64xf32>, vector<64x64xf32>, vector<8x64xf32> -> vector<8x64xf32>
    %c0_9 = arith.constant 0 : index
    %c0_10 = arith.constant 0 : index
    %13 = vector.load %arg6[%c0_9, %c0_10] : memref<1x64xf32, #tpu.memory_space<vmem>>, vector<1x64xf32>
    %14 = vector.broadcast %13 : vector<1x64xf32> to vector<8x64xf32>
    %15 = arith.addf %12, %14 : vector<8x64xf32>
    %16 = arith.negf %15 : vector<8x64xf32>
    %17 = math.exp %16 : vector<8x64xf32>
    %cst_11 = arith.constant 1.000000e+00 : f32
    %18 = vector.broadcast %cst_11 : f32 to vector<8x64xf32>
    %19 = arith.addf %18, %17 : vector<8x64xf32>
    %20 = arith.divf %18, %19 : vector<8x64xf32>
    %c0_12 = arith.constant 0 : index
    %c0_13 = arith.constant 0 : index
    %21 = vector.load %arg1[%c0_12, %c0_13] : memref<8x3xf32, #tpu.memory_space<vmem>>, vector<8x3xf32>
    %c0_14 = arith.constant 0 : index
    %c0_15 = arith.constant 0 : index
    %22 = vector.load %arg7[%c0_14, %c0_15] : memref<3x32xf32, #tpu.memory_space<vmem>>, vector<3x32xf32>
    %c0_16 = arith.constant 0 : index
    %c0_17 = arith.constant 0 : index
    %23 = vector.load %arg8[%c0_16, %c0_17] : memref<1x32xf32, #tpu.memory_space<vmem>>, vector<1x32xf32>
    %24 = vector.extract_strided_slice %21 {offsets = [0, 0], sizes = [8, 1], strides = [1, 1]} : vector<8x3xf32> to vector<8x1xf32>
    %25 = vector.extract_strided_slice %22 {offsets = [0, 0], sizes = [1, 32], strides = [1, 1]} : vector<3x32xf32> to vector<1x32xf32>
    %26 = vector.broadcast %24 : vector<8x1xf32> to vector<8x32xf32>
    %27 = vector.broadcast %25 : vector<1x32xf32> to vector<8x32xf32>
    %28 = arith.mulf %26, %27 : vector<8x32xf32>
    %29 = vector.broadcast %23 : vector<1x32xf32> to vector<8x32xf32>
    %30 = arith.addf %29, %28 : vector<8x32xf32>
    %31 = vector.extract_strided_slice %21 {offsets = [0, 1], sizes = [8, 1], strides = [1, 1]} : vector<8x3xf32> to vector<8x1xf32>
    %32 = vector.extract_strided_slice %22 {offsets = [1, 0], sizes = [1, 32], strides = [1, 1]} : vector<3x32xf32> to vector<1x32xf32>
    %33 = vector.broadcast %31 : vector<8x1xf32> to vector<8x32xf32>
    %34 = vector.broadcast %32 : vector<1x32xf32> to vector<8x32xf32>
    %35 = arith.mulf %33, %34 : vector<8x32xf32>
    %36 = arith.addf %30, %35 : vector<8x32xf32>
    %37 = vector.extract_strided_slice %21 {offsets = [0, 2], sizes = [8, 1], strides = [1, 1]} : vector<8x3xf32> to vector<8x1xf32>
    %38 = vector.extract_strided_slice %22 {offsets = [2, 0], sizes = [1, 32], strides = [1, 1]} : vector<3x32xf32> to vector<1x32xf32>
    %39 = vector.broadcast %37 : vector<8x1xf32> to vector<8x32xf32>
    %40 = vector.broadcast %38 : vector<1x32xf32> to vector<8x32xf32>
    %41 = arith.mulf %39, %40 : vector<8x32xf32>
    %42 = arith.addf %36, %41 : vector<8x32xf32>
    %43 = arith.negf %42 : vector<8x32xf32>
    %44 = math.exp %43 : vector<8x32xf32>
    %cst_18 = arith.constant 1.000000e+00 : f32
    %45 = vector.broadcast %cst_18 : f32 to vector<8x32xf32>
    %46 = arith.addf %45, %44 : vector<8x32xf32>
    %47 = arith.divf %45, %46 : vector<8x32xf32>
    %c0_19 = arith.constant 0 : index
    %c0_20 = arith.constant 0 : index
    %48 = vector.load %arg9[%c0_19, %c0_20] : memref<64x32xf32, #tpu.memory_space<vmem>>, vector<64x32xf32>
    %cst_21 = arith.constant dense<0.000000e+00> : vector<8x32xf32>
    %49 = tpu.matmul %20, %48, %cst_21 {dimension_numbers = #tpu.dot_dimension_numbers<[1], [0], [0], [1], [0, 0, 1, 1], [], []>} : vector<8x64xf32>, vector<64x32xf32>, vector<8x32xf32> -> vector<8x32xf32>
    %c0_22 = arith.constant 0 : index
    %c0_23 = arith.constant 0 : index
    %50 = vector.load %arg10[%c0_22, %c0_23] : memref<32x32xf32, #tpu.memory_space<vmem>>, vector<32x32xf32>
    %cst_24 = arith.constant dense<0.000000e+00> : vector<8x32xf32>
    %51 = tpu.matmul %47, %50, %cst_24 {dimension_numbers = #tpu.dot_dimension_numbers<[1], [0], [0], [1], [0, 0, 1, 1], [], []>} : vector<8x32xf32>, vector<32x32xf32>, vector<8x32xf32> -> vector<8x32xf32>
    %52 = arith.addf %49, %51 : vector<8x32xf32>
    %c0_25 = arith.constant 0 : index
    %c0_26 = arith.constant 0 : index
    %53 = vector.load %arg11[%c0_25, %c0_26] : memref<1x32xf32, #tpu.memory_space<vmem>>, vector<1x32xf32>
    %54 = vector.broadcast %53 : vector<1x32xf32> to vector<8x32xf32>
    %55 = arith.addf %52, %54 : vector<8x32xf32>
    %c0_27 = arith.constant 0 : index
    %c0_28 = arith.constant 0 : index
    %56 = vector.load %arg12[%c0_27, %c0_28] : memref<8x32xf32, #tpu.memory_space<vmem>>, vector<8x32xf32>
    tpu.vector_store %arg12[%c0_27, %c0_28], %55 {strides = array<i32>} : memref<8x32xf32, #tpu.memory_space<vmem>>, vector<8x32xf32>,
    return
  }
  func.func @transform_0(%arg0: i32) -> (i32, i32) {
    %c0_i32 = arith.constant 0 : i32
    %c0_i32_0 = arith.constant 0 : i32
    return %arg0, %c0_i32 : i32, i32
  }
  func.func @transform_1(%arg0: i32) -> (i32, i32) {
    %c0_i32 = arith.constant 0 : i32
    %c0_i32_0 = arith.constant 0 : i32
    return %arg0, %c0_i32 : i32, i32
  }
  func.func @transform_2(%arg0: i32) -> (i32, i32) {
    %c0_i32 = arith.constant 0 : i32
    %c0_i32_0 = arith.constant 0 : i32
    %c0_i32_1 = arith.constant 0 : i32
    return %c0_i32, %c0_i32_0 : i32, i32
  }
  func.func @transform_3(%arg0: i32) -> (i32, i32) {
    %c0_i32 = arith.constant 0 : i32
    %c0_i32_0 = arith.constant 0 : i32
    %c0_i32_1 = arith.constant 0 : i32
    return %c0_i32, %c0_i32_0 : i32, i32
  }
  func.func @transform_4(%arg0: i32) -> (i32, i32) {
    %c0_i32 = arith.constant 0 : i32
    %c0_i32_0 = arith.constant 0 : i32
    %c0_i32_1 = arith.constant 0 : i32
    return %c0_i32, %c0_i32_0 : i32, i32
  }
  func.func @transform_5(%arg0: i32) -> (i32, i32) {
    %c0_i32 = arith.constant 0 : i32
    %c0_i32_0 = arith.constant 0 : i32
    %c0_i32_1 = arith.constant 0 : i32
    return %c0_i32, %c0_i32_0 : i32, i32
  }
  func.func @transform_6(%arg0: i32) -> (i32, i32) {
    %c0_i32 = arith.constant 0 : i32
    %c0_i32_0 = arith.constant 0 : i32
    %c0_i32_1 = arith.constant 0 : i32
    return %c0_i32, %c0_i32_0 : i32, i32
  }
  func.func @transform_7(%arg0: i32) -> (i32, i32) {
    %c0_i32 = arith.constant 0 : i32
    %c0_i32_0 = arith.constant 0 : i32
    %c0_i32_1 = arith.constant 0 : i32
    return %c0_i32, %c0_i32_0 : i32, i32
  }
  func.func @transform_8(%arg0: i32) -> (i32, i32) {
    %c0_i32 = arith.constant 0 : i32
    %c0_i32_0 = arith.constant 0 : i32
    %c0_i32_1 = arith.constant 0 : i32
    return %c0_i32, %c0_i32_0 : i32, i32
  }
  func.func @transform_9(%arg0: i32) -> (i32, i32) {
    %c0_i32 = arith.constant 0 : i32
    %c0_i32_0 = arith.constant 0 : i32
    %c0_i32_1 = arith.constant 0 : i32
    return %c0_i32, %c0_i32_0 : i32, i32
  }
  func.func @transform_10(%arg0: i32) -> (i32, i32) {
    %c0_i32 = arith.constant 0 : i32
    %c0_i32_0 = arith.constant 0 : i32
    %c0_i32_1 = arith.constant 0 : i32
    return %c0_i32, %c0_i32_0 : i32, i32
  }
  func.func @transform_11(%arg0: i32) -> (i32, i32) {
    %c0_i32 = arith.constant 0 : i32
    %c0_i32_0 = arith.constant 0 : i32
    return %arg0, %c0_i32 : i32, i32
  }
}

</mosaic_0001>

<llo_original>
// kernel: tpu_custom_call.1
$region0: #{tpu_custom_call.1}
  #allocation0 [shape = 'u32[]', space=smem, size = 0x4, offset = 0x4, fixed_abs, tag = 'smem constant byte address 0x4 - core index']
  #allocation1 [shape = 'u32[144,128]{1,0:T(1,128)}', space=vmem, size = 0x12000, scoped, tag = 'internal scratch']
  %s0 = inlined_call_operand.vmem [shape: f32[16,3], index: 0, kind: input, shape index: {}]
  %s1 = inlined_call_operand.vmem [shape: f32[16,32], index: 1, kind: input, shape index: {}]
  %s2 = inlined_call_operand.vmem [shape: f32[32,64], index: 2, kind: input, shape index: {}]
  %s3 = inlined_call_operand.vmem [shape: f32[1,64], index: 3, kind: input, shape index: {}]
  %s4 = inlined_call_operand.vmem [shape: f32[64,64], index: 4, kind: input, shape index: {}]
  %s5 = inlined_call_operand.vmem [shape: f32[1,64], index: 5, kind: input, shape index: {}]
  %s6 = inlined_call_operand.hbm [shape: f32[3,32], index: 6, kind: input, shape index: {}]
  %s7 = inlined_call_operand.hbm [shape: f32[1,32], index: 7, kind: input, shape index: {}]
  %s8 = inlined_call_operand.vmem [shape: f32[64,32], index: 8, kind: input, shape index: {}]
  %s9 = inlined_call_operand.hbm [shape: f32[32,32], index: 9, kind: input, shape index: {}]
  %s10 = inlined_call_operand.vmem [shape: f32[1,32], index: 10, kind: input, shape index: {}]
  %s11 = inlined_call_operand.hbm [shape: f32[16,32], index: 11, kind: output, shape index: {}]
  %s12 = sld [smem:[#allocation0]]
  $region89: #{tpu_custom_call.1} parent=0
    _
  %s14 = ssub.s32 1, %s12
  %s15 = scalar_select 0, %s14, %s12
  $region1: #{tpu_custom_call.1} parent=0
    #allocation2 [shape = 'u8[2048]{0}', space=vmem, size = 0x800, scoped, tag = 'input window, operand 6, single buffered']
    #allocation3 [shape = 's32[2]{0}', space=sflag, size = 0x8, scoped, tag = 'scoped memory for tpu_custom_call.1']
    #allocation4 [shape = 's32[2]{0}', space=sflag, size = 0x8, scoped, tag = 'scoped memory for tpu_custom_call.1']
    #allocation5 [shape = 'u8[512]{0}', space=vmem, size = 0x400, scoped, tag = 'input window, operand 7, single buffered']
    #allocation6 [shape = 's32[1]{0}', space=sflag, size = 0x4, scoped, tag = 'scoped memory for tpu_custom_call.1']
    #allocation7 [shape = 'u8[16384]{0}', space=vmem, size = 0x4000, scoped, tag = 'input window, operand 9, single buffered']
    #allocation8 [shape = 'u8[8192]{0}', space=vmem, size = 0x2000, scoped, tag = 'output window, operand 0']
    %16 = vsyncpa [#allocation3], 0
    %17 = vsyncpa [#allocation6], 0
    %18 = vsyncpa [#allocation4], 0
    %s19 = scalar_lea.sflag [#allocation4], 1
    %20 = vsyncpa %s19, 0
    loop: start=0, step=1, limit=4
    $region2: #{tpu_custom_call.1} parent=1 // loop_pre_header
      _
    $region3: #{tpu_custom_call.1} parent=1 // loop_header
      %s22 = sphi 0, %s26
      %p23 = scmp.ge.s32.totalorder %s22, 4
      %s32 = sphi 0, %s34
      %s35 = sphi 0, %s32
      %s36 = sphi 0, %s35
      %s52 = sphi 0, %s36
      %s58 = sphi 0, %s60
      %s61 = sphi 0, %s58
      %s62 = sphi 0, %s61
      %s78 = sphi 0, %s62
      %s82 = sphi 0, %s82
      %s84 = sphi 0, %s82
      %s85 = sphi 0, %s84
      %s99 = sphi 0, %s85
      %s103 = sphi 0, %s103
      %s105 = sphi 0, %s103
      %s106 = sphi 0, %s105
      %s120 = sphi 0, %s106
      %s124 = sphi 0, %s124
      %s126 = sphi 0, %s124
      %s127 = sphi 0, %s126
      %s141 = sphi 0, %s127
      %s145 = sphi 0, %s145
      %s147 = sphi 0, %s145
      %s148 = sphi 0, %s147
      %s162 = sphi 0, %s148
      %s166 = sphi 0, %s166
      %s168 = sphi 0, %s166
      %s169 = sphi 0, %s168
      %s183 = sphi 0, %s169
      %s187 = sphi 0, %s187
      %s189 = sphi 0, %s187
      %s190 = sphi 0, %s189
      %s204 = sphi 0, %s190
      %s208 = sphi 0, %s208
      %s210 = sphi 0, %s208
      %s211 = sphi 0, %s210
      %s225 = sphi 0, %s211
      %s229 = sphi 0, %s229
      %s231 = sphi 0, %s229
      %s232 = sphi 0, %s231
      %s246 = sphi 0, %s232
      %s250 = sphi 0, %s250
      %s252 = sphi 0, %s250
      %s253 = sphi 0, %s252
      %s267 = sphi 0, %s253
      %s273 = sphi 0, %s275
      %s276 = sphi 0, %s273
      %s277 = sphi 0, %s276
      %s293 = sphi 0, %s277
    $region4: #{tpu_custom_call.1} parent=1 // loop_header_branch
      %25 = sbr.rel (%p23) target = $region8
    $region5: #{tpu_custom_call.1} parent=1 // loop_body
      %s27 = ssub.s32 %s22, 1
      %s28 = ssub.s32 %s22, 2
      %s29 = sadd.s32 %s22, 1
      %s30 = ssub.s32 %s22, %s29
      %p31 = scmp.eq.s32.totalorder %s30, 0
      %s33 = sadd.s32 %s32, 1
      %s34 = scalar_select %p31, %s32, %s33
      %p37 = pneg %p31
      %p38 = scmp.eq.s32.totalorder %s22, 1
      %p39 = por %p37, %p38
      %p40 = scmp.ne.s32.totalorder %s32, %s35
      %p41 = scmp.eq.s32.totalorder %s22, 0
      %p42 = por %p40, %p41
      %p43 = scmp.ne.s32.totalorder %s32, %s35
      %p44 = scmp.eq.s32.totalorder %s27, 1
      %p45 = por %p43, %p44
      %p46 = scmp.ne.s32.totalorder %s35, %s36
      %p47 = scmp.eq.s32.totalorder %s27, 0
      %p48 = por %p46, %p47
      %p49 = scmp.ne.s32.totalorder %s35, %s36
      %p50 = scmp.eq.s32.totalorder %s28, 1
      %p51 = por %p49, %p50
      %p53 = scmp.ne.s32.totalorder %s36, %s52
      %p54 = scmp.eq.s32.totalorder %s28, 0
      %p55 = por %p53, %p54
      %s56 = ssub.s32 %s22, %s29
      %p57 = scmp.eq.s32.totalorder %s56, 0
      %s59 = sadd.s32 %s58, 1
      %s60 = scalar_select %p57, %s58, %s59
      %p63 = pneg %p57
      %p64 = scmp.eq.s32.totalorder %s22, 1
      %p65 = por %p63, %p64
      %p66 = scmp.ne.s32.totalorder %s58, %s61
      %p67 = scmp.eq.s32.totalorder %s22, 0
      %p68 = por %p66, %p67
      %p69 = scmp.ne.s32.totalorder %s58, %s61
      %p70 = scmp.eq.s32.totalorder %s27, 1
      %p71 = por %p69, %p70
      %p72 = scmp.ne.s32.totalorder %s61, %s62
      %p73 = scmp.eq.s32.totalorder %s27, 0
      %p74 = por %p72, %p73
      %p75 = scmp.ne.s32.totalorder %s61, %s62
      %p76 = scmp.eq.s32.totalorder %s28, 1
      %p77 = por %p75, %p76
      %p79 = scmp.ne.s32.totalorder %s62, %s78
      %p80 = scmp.eq.s32.totalorder %s28, 0
      %p81 = por %p79, %p80
      %s83 = sadd.s32 %s82, 1
      %p86 = scmp.eq.s32.totalorder %s22, 1
      %p87 = scmp.ne.s32.totalorder %s82, %s84
      %p88 = scmp.eq.s32.totalorder %s22, 0
      %p89 = por %p87, %p88
      %p90 = scmp.ne.s32.totalorder %s82, %s84
      %p91 = scmp.eq.s32.totalorder %s27, 1
      %p92 = por %p90, %p91
      %p93 = scmp.ne.s32.totalorder %s84, %s85
      %p94 = scmp.eq.s32.totalorder %s27, 0
      %p95 = por %p93, %p94
      %p96 = scmp.ne.s32.totalorder %s84, %s85
      %p97 = scmp.eq.s32.totalorder %s28, 1
      %p98 = por %p96, %p97
      %p100 = scmp.ne.s32.totalorder %s85, %s99
      %p101 = scmp.eq.s32.totalorder %s28, 0
      %p102 = por %p100, %p101
      %s104 = sadd.s32 %s103, 1
      %p107 = scmp.eq.s32.totalorder %s22, 1
      %p108 = scmp.ne.s32.totalorder %s103, %s105
      %p109 = scmp.eq.s32.totalorder %s22, 0
      %p110 = por %p108, %p109
      %p111 = scmp.ne.s32.totalorder %s103, %s105
      %p112 = scmp.eq.s32.totalorder %s27, 1
      %p113 = por %p111, %p112
      %p114 = scmp.ne.s32.totalorder %s105, %s106
      %p115 = scmp.eq.s32.totalorder %s27, 0
      %p116 = por %p114, %p115
      %p117 = scmp.ne.s32.totalorder %s105, %s106
      %p118 = scmp.eq.s32.totalorder %s28, 1
      %p119 = por %p117, %p118
      %p121 = scmp.ne.s32.totalorder %s106, %s120
      %p122 = scmp.eq.s32.totalorder %s28, 0
      %p123 = por %p121, %p122
      %s125 = sadd.s32 %s124, 1
      %p128 = scmp.eq.s32.totalorder %s22, 1
      %p129 = scmp.ne.s32.totalorder %s124, %s126
      %p130 = scmp.eq.s32.totalorder %s22, 0
      %p131 = por %p129, %p130
      %p132 = scmp.ne.s32.totalorder %s124, %s126
      %p133 = scmp.eq.s32.totalorder %s27, 1
      %p134 = por %p132, %p133
      %p135 = scmp.ne.s32.totalorder %s126, %s127
      %p136 = scmp.eq.s32.totalorder %s27, 0
      %p137 = por %p135, %p136
      %p138 = scmp.ne.s32.totalorder %s126, %s127
      %p139 = scmp.eq.s32.totalorder %s28, 1
      %p140 = por %p138, %p139
      %p142 = scmp.ne.s32.totalorder %s127, %s141
      %p143 = scmp.eq.s32.totalorder %s28, 0
      %p144 = por %p142, %p143
      %s146 = sadd.s32 %s145, 1
      %p149 = scmp.eq.s32.totalorder %s22, 1
      %p150 = scmp.ne.s32.totalorder %s145, %s147
      %p151 = scmp.eq.s32.totalorder %s22, 0
      %p152 = por %p150, %p151
      %p153 = scmp.ne.s32.totalorder %s145, %s147
      %p154 = scmp.eq.s32.totalorder %s27, 1
      %p155 = por %p153, %p154
      %p156 = scmp.ne.s32.totalorder %s147, %s148
      %p157 = scmp.eq.s32.totalorder %s27, 0
      %p158 = por %p156, %p157
      %p159 = scmp.ne.s32.totalorder %s147, %s148
      %p160 = scmp.eq.s32.totalorder %s28, 1
      %p161 = por %p159, %p160
      %p163 = scmp.ne.s32.totalorder %s148, %s162
      %p164 = scmp.eq.s32.totalorder %s28, 0
      %p165 = por %p163, %p164
      %s167 = sadd.s32 %s166, 1
      %p170 = scmp.eq.s32.totalorder %s22, 1
      %p171 = scmp.ne.s32.totalorder %s166, %s168
      %p172 = scmp.eq.s32.totalorder %s22, 0
      %p173 = por %p171, %p172
      %p174 = scmp.ne.s32.totalorder %s166, %s168
      %p175 = scmp.eq.s32.totalorder %s27, 1
      %p176 = por %p174, %p175
      %p177 = scmp.ne.s32.totalorder %s168, %s169
      %p178 = scmp.eq.s32.totalorder %s27, 0
      %p179 = por %p177, %p178
      %p180 = scmp.ne.s32.totalorder %s168, %s169
      %p181 = scmp.eq.s32.totalorder %s28, 1
      %p182 = por %p180, %p181
      %p184 = scmp.ne.s32.totalorder %s169, %s183
      %p185 = scmp.eq.s32.totalorder %s28, 0
      %p186 = por %p184, %p185
      %s188 = sadd.s32 %s187, 1
      %p191 = scmp.eq.s32.totalorder %s22, 1
      %p192 = scmp.ne.s32.totalorder %s187, %s189
      %p193 = scmp.eq.s32.totalorder %s22, 0
      %p194 = por %p192, %p193
      %p195 = scmp.ne.s32.totalorder %s187, %s189
      %p196 = scmp.eq.s32.totalorder %s27, 1
      %p197 = por %p195, %p196
      %p198 = scmp.ne.s32.totalorder %s189, %s190
      %p199 = scmp.eq.s32.totalorder %s27, 0
      %p200 = por %p198, %p199
      %p201 = scmp.ne.s32.totalorder %s189, %s190
      %p202 = scmp.eq.s32.totalorder %s28, 1
      %p203 = por %p201, %p202
      %p205 = scmp.ne.s32.totalorder %s190, %s204
      %p206 = scmp.eq.s32.totalorder %s28, 0
      %p207 = por %p205, %p206
      %s209 = sadd.s32 %s208, 1
      %p212 = scmp.eq.s32.totalorder %s22, 1
      %p213 = scmp.ne.s32.totalorder %s208, %s210
      %p214 = scmp.eq.s32.totalorder %s22, 0
      %p215 = por %p213, %p214
      %p216 = scmp.ne.s32.totalorder %s208, %s210
      %p217 = scmp.eq.s32.totalorder %s27, 1
      %p218 = por %p216, %p217
      %p219 = scmp.ne.s32.totalorder %s210, %s211
      %p220 = scmp.eq.s32.totalorder %s27, 0
      %p221 = por %p219, %p220
      %p222 = scmp.ne.s32.totalorder %s210, %s211
      %p223 = scmp.eq.s32.totalorder %s28, 1
      %p224 = por %p222, %p223
      %p226 = scmp.ne.s32.totalorder %s211, %s225
      %p227 = scmp.eq.s32.totalorder %s28, 0
      %p228 = por %p226, %p227
      %s230 = sadd.s32 %s229, 1
      %p233 = scmp.eq.s32.totalorder %s22, 1
      %p234 = scmp.ne.s32.totalorder %s229, %s231
      %p235 = scmp.eq.s32.totalorder %s22, 0
      %p236 = por %p234, %p235
      %p237 = scmp.ne.s32.totalorder %s229, %s231
      %p238 = scmp.eq.s32.totalorder %s27, 1
      %p239 = por %p237, %p238
      %p240 = scmp.ne.s32.totalorder %s231, %s232
      %p241 = scmp.eq.s32.totalorder %s27, 0
      %p242 = por %p240, %p241
      %p243 = scmp.ne.s32.totalorder %s231, %s232
      %p244 = scmp.eq.s32.totalorder %s28, 1
      %p245 = por %p243, %p244
      %p247 = scmp.ne.s32.totalorder %s232, %s246
      %p248 = scmp.eq.s32.totalorder %s28, 0
      %p249 = por %p247, %p248
      %s251 = sadd.s32 %s250, 1
      %p254 = scmp.eq.s32.totalorder %s22, 1
      %p255 = scmp.ne.s32.totalorder %s250, %s252
      %p256 = scmp.eq.s32.totalorder %s22, 0
      %p257 = por %p255, %p256
      %p258 = scmp.ne.s32.totalorder %s250, %s252
      %p259 = scmp.eq.s32.totalorder %s27, 1
      %p260 = por %p258, %p259
      %p261 = scmp.ne.s32.totalorder %s252, %s253
      %p262 = scmp.eq.s32.totalorder %s27, 0
      %p263 = por %p261, %p262
      %p264 = scmp.ne.s32.totalorder %s252, %s253
      %p265 = scmp.eq.s32.totalorder %s28, 1
      %p266 = por %p264, %p265
      %p268 = scmp.ne.s32.totalorder %s253, %s267
      %p269 = scmp.eq.s32.totalorder %s28, 0
      %p270 = por %p268, %p269
      %s271 = ssub.s32 %s22, %s29
      %p272 = scmp.eq.s32.totalorder %s271, 0
      %s274 = sadd.s32 %s273, 1
      %s275 = scalar_select %p272, %s273, %s274
      %p278 = pneg %p272
      %p279 = scmp.eq.s32.totalorder %s22, 1
      %p280 = por %p278, %p279
      %p281 = scmp.ne.s32.totalorder %s273, %s276
      %p282 = scmp.eq.s32.totalorder %s22, 0
      %p283 = por %p281, %p282
      %p284 = scmp.ne.s32.totalorder %s273, %s276
      %p285 = scmp.eq.s32.totalorder %s27, 1
      %p286 = por %p284, %p285
      %p287 = scmp.ne.s32.totalorder %s276, %s277
      %p288 = scmp.eq.s32.totalorder %s27, 0
      %p289 = por %p287, %p288
      %p290 = scmp.ne.s32.totalorder %s276, %s277
      %p291 = scmp.eq.s32.totalorder %s28, 1
      %p292 = por %p290, %p291
      %p294 = scmp.ne.s32.totalorder %s277, %s293
      %p295 = scmp.eq.s32.totalorder %s28, 0
      %p296 = por %p294, %p295
      %p297 = scmp.le.s32.totalorder 1, %s22
      %p298 = scmp.lt.s32.totalorder %s22, 3
      %p299 = pnand %p297, %p298
      %p300 = pneg %p299
      // Predicated region
      $region9: #{tpu_custom_call.1} parent=5 // pred_check
        _
      $region10: #{tpu_custom_call.1} parent=5 // pred_check_branch
        %302 = sbr.rel (%p299) target = $region12
      $region11: #{tpu_custom_call.1} parent=5 // pred_region
        %s303 = ssub.s32 %s22, 1
        // Predicated region
        $region13: #{tpu_custom_call.1} parent=11 // pred_check
          %p304 = pneg %p95
        $region14: #{tpu_custom_call.1} parent=11 // pred_check_branch
          %306 = sbr.rel (%p304) target = $region16
        $region15: #{tpu_custom_call.1} parent=11 // pred_region
          _
        $region16: #{tpu_custom_call.1} parent=11 // pred_fallthru
          _
        // Predicated region
        $region17: #{tpu_custom_call.1} parent=11 // pred_check
          %p307 = pneg %p116
        $region18: #{tpu_custom_call.1} parent=11 // pred_check_branch
          %309 = sbr.rel (%p307) target = $region20
        $region19: #{tpu_custom_call.1} parent=11 // pred_region
          _
        $region20: #{tpu_custom_call.1} parent=11 // pred_fallthru
          _
        // Predicated region
        $region21: #{tpu_custom_call.1} parent=11 // pred_check
          %p310 = pneg %p137
        $region22: #{tpu_custom_call.1} parent=11 // pred_check_branch
          %312 = sbr.rel (%p310) target = $region24
        $region23: #{tpu_custom_call.1} parent=11 // pred_region
          _
        $region24: #{tpu_custom_call.1} parent=11 // pred_fallthru
          _
        // Predicated region
        $region25: #{tpu_custom_call.1} parent=11 // pred_check
          %p313 = pneg %p158
        $region26: #{tpu_custom_call.1} parent=11 // pred_check_branch
          %315 = sbr.rel (%p313) target = $region28
        $region27: #{tpu_custom_call.1} parent=11 // pred_region
          _
        $region28: #{tpu_custom_call.1} parent=11 // pred_fallthru
          _
        // Predicated region
        $region29: #{tpu_custom_call.1} parent=11 // pred_check
          %p316 = pneg %p179
        $region30: #{tpu_custom_call.1} parent=11 // pred_check_branch
          %318 = sbr.rel (%p316) target = $region32
        $region31: #{tpu_custom_call.1} parent=11 // pred_region
          %s320 = ssub.s32 64, 64
          %321 = vsyncadd [#allocation3], %s320
          %s323 = sshll.u32 [#allocation2], 4
          %s324 = int_to_ptr.vmem [resolvable:$true] %s323
          %326 = dma.hbm_to_vmem [thread:$0]  %s6, 64, %s324, [#allocation3]
        $region32: #{tpu_custom_call.1} parent=11 // pred_fallthru
          _
        // Predicated region
        $region33: #{tpu_custom_call.1} parent=11 // pred_check
          %p327 = pneg %p200
        $region34: #{tpu_custom_call.1} parent=11 // pred_check_branch
          %329 = sbr.rel (%p327) target = $region36
        $region35: #{tpu_custom_call.1} parent=11 // pred_region
          %s331 = ssub.s32 16, 16
          %332 = vsyncadd [#allocation6], %s331
          %s334 = sshll.u32 [#allocation5], 4
          %s335 = int_to_ptr.vmem [resolvable:$true] %s334
          %337 = dma.hbm_to_vmem [thread:$0]  %s7, 16, %s335, [#allocation6]
        $region36: #{tpu_custom_call.1} parent=11 // pred_fallthru
          _
        // Predicated region
        $region37: #{tpu_custom_call.1} parent=11 // pred_check
          %p338 = pneg %p221
        $region38: #{tpu_custom_call.1} parent=11 // pred_check_branch
          %340 = sbr.rel (%p338) target = $region40
        $region39: #{tpu_custom_call.1} parent=11 // pred_region
          _
        $region40: #{tpu_custom_call.1} parent=11 // pred_fallthru
          _
        // Predicated region
        $region41: #{tpu_custom_call.1} parent=11 // pred_check
          %p341 = pneg %p242
        $region42: #{tpu_custom_call.1} parent=11 // pred_check_branch
          %343 = sbr.rel (%p341) target = $region44
        $region43: #{tpu_custom_call.1} parent=11 // pred_region
          %s345 = ssub.s32 512, 512
          %346 = vsyncadd [#allocation6], %s345
          %s347 = sshll.u32 [#allocation7], 4
          %s348 = int_to_ptr.vmem [resolvable:$true] %s347
          %353 = dma.hbm_to_vmem [thread:$0]  %s9, 512, %s348, [#allocation6], 128, 128, 8
        $region44: #{tpu_custom_call.1} parent=11 // pred_fallthru
          _
        // Predicated region
        $region45: #{tpu_custom_call.1} parent=11 // pred_check
          %p354 = pneg %p263
        $region46: #{tpu_custom_call.1} parent=11 // pred_check_branch
          %356 = sbr.rel (%p354) target = $region48
        $region47: #{tpu_custom_call.1} parent=11 // pred_region
          _
        $region48: #{tpu_custom_call.1} parent=11 // pred_fallthru
          _
      $region12: #{tpu_custom_call.1} parent=5 // pred_fallthru
        _
      %p357 = scmp.lt.s32.totalorder %s22, 2
      // Predicated region
      $region49: #{tpu_custom_call.1} parent=5 // pred_check
        %p358 = pneg %p357
      $region50: #{tpu_custom_call.1} parent=5 // pred_check_branch
        %360 = sbr.rel (%p358) target = $region52
      $region51: #{tpu_custom_call.1} parent=5 // pred_region
        // Predicated region
        $region53: #{tpu_custom_call.1} parent=51 // pred_check
          %p361 = pneg %p42
        $region54: #{tpu_custom_call.1} parent=51 // pred_check_branch
          %363 = sbr.rel (%p361) target = $region56
        $region55: #{tpu_custom_call.1} parent=51 // pred_region
          %p364 = scmp.lt.s32.totalorder %s22, 1
          %s365 = scalar_select %p364, %s22, 1
          %s366 = smul.addr %s365, 8
          %s367 = scalar_lea.vmem %s0, %s366
        $region56: #{tpu_custom_call.1} parent=51 // pred_fallthru
          _
        // Predicated region
        $region57: #{tpu_custom_call.1} parent=51 // pred_check
          %p368 = pneg %p68
        $region58: #{tpu_custom_call.1} parent=51 // pred_check_branch
          %370 = sbr.rel (%p368) target = $region60
        $region59: #{tpu_custom_call.1} parent=51 // pred_region
          %p371 = scmp.lt.s32.totalorder %s22, 1
          %s372 = scalar_select %p371, %s22, 1
          %s373 = smul.addr %s372, 8
          %s374 = scalar_lea.vmem %s1, %s373
        $region60: #{tpu_custom_call.1} parent=51 // pred_fallthru
          _
      $region52: #{tpu_custom_call.1} parent=5 // pred_fallthru
        _
      %p375 = scmp.le.s32.totalorder 1, %s22
      %p376 = scmp.lt.s32.totalorder %s22, 3
      %p377 = pnand %p375, %p376
      %p378 = pneg %p377
      // Predicated region
      $region61: #{tpu_custom_call.1} parent=5 // pred_check
        _
      $region62: #{tpu_custom_call.1} parent=5 // pred_check_branch
        %380 = sbr.rel (%p377) target = $region64
      $region63: #{tpu_custom_call.1} parent=5 // pred_region
        %s381 = ssub.s32 %s22, 1
        // Predicated region
        $region65: #{tpu_custom_call.1} parent=63 // pred_check
          %p382 = pneg %p179
        $region66: #{tpu_custom_call.1} parent=63 // pred_check_branch
          %384 = sbr.rel (%p382) target = $region68
        $region67: #{tpu_custom_call.1} parent=63 // pred_region
          %385 = dma.done [#allocation3], 64
        $region68: #{tpu_custom_call.1} parent=63 // pred_fallthru
          _
        // Predicated region
        $region69: #{tpu_custom_call.1} parent=63 // pred_check
          %p386 = pneg %p200
        $region70: #{tpu_custom_call.1} parent=63 // pred_check_branch
          %388 = sbr.rel (%p386) target = $region72
        $region71: #{tpu_custom_call.1} parent=63 // pred_region
          %389 = dma.done [#allocation6], 16
        $region72: #{tpu_custom_call.1} parent=63 // pred_fallthru
          _
        // Predicated region
        $region73: #{tpu_custom_call.1} parent=63 // pred_check
          %p390 = pneg %p242
        $region74: #{tpu_custom_call.1} parent=63 // pred_check_branch
          %392 = sbr.rel (%p390) target = $region76
        $region75: #{tpu_custom_call.1} parent=63 // pred_region
          %393 = dma.done [#allocation6], 512
        $region76: #{tpu_custom_call.1} parent=63 // pred_fallthru
          _
        %p394 = scmp.lt.s32.totalorder %s27, 1
        %s395 = scalar_select %p394, %s27, 1
        %s396 = smul.addr %s395, 8
        %s397 = scalar_lea.vmem %s0, %s396
        %p398 = pneg %p48
        %p399 = pneg %p45
        %p400 = scmp.lt.s32.totalorder %s27, 1
        %s401 = scalar_select %p400, %s27, 1
        %s402 = smul.addr %s401, 8
        %s403 = scalar_lea.vmem %s1, %s402
        %p404 = pneg %p74
        %p405 = pneg %p71
        %p406 = pneg %p95
        %p407 = pneg %p92
        %p408 = pneg %p116
        %p409 = pneg %p113
        %p410 = pneg %p137
        %p411 = pneg %p134
        %p412 = pneg %p158
        %p413 = pneg %p155
        %p414 = pneg %p179
        %p415 = pneg %p176
        %p416 = pneg %p200
        %p417 = pneg %p197
        %p418 = pneg %p221
        %p419 = pneg %p218
        %p420 = pneg %p242
        %p421 = pneg %p239
        %p422 = pneg %p263
        %p423 = pneg %p260
        %p424 = pneg %p289
        %p425 = pneg %p286
        %s426 = sand.u32 %s276, 1
        %s427 = scalar_lea.sflag [#allocation4], %s426
        %s428 = sand.u32 %s276, 1
        %s429 = smul.addr %s428, 8
        %s430 = scalar_lea.vmem [#allocation8], %s429
        %p431 = scmp.lt.s32.totalorder %s27, 1
        %s432 = scalar_select %p431, %s27, 1
        %s433 = smul.addr %s432, 8
        %s434 = scalar_lea.vmem %s0, %s433
        %p435 = scmp.lt.s32.totalorder %s27, 1
        %s436 = scalar_select %p435, %s27, 1
        %s437 = smul.addr %s436, 8
        %s438 = scalar_lea.vmem %s1, %s437
        %v439 = vld [vmem:[%s438] sm:$0xff]
        %v440 = vld [vmem:[%s2] sm:$0xff]
        %v441 = vld [vmem:[%s2 + $0x8] sm:$0xff]
        %v442 = vld [vmem:[%s2 + $0x10] sm:$0xff]
        %v443 = vld [vmem:[%s2 + $0x18] sm:$0xff]
        %v444 = vld [vmem:[%s3] sm:$0x1]
        %v446 = vlaneseq
        %v447 = vshrl.u32 %v446, 7
        %v448 = vsub.s32 0, %v447
        %v449 = vrot.slane %v444, %v448
        %vm451 = vcmask 261120
        %v453 = vsel %vm451, %v439, 0
        %455 = vmatprep.subr.mxu0 0.0
        %456 = vmatpush1.msra.mxu0 %v440
        %457 = vmatprep.subr.mxu0 0.0
        %458 = vmatpush1.msra.mxu0 %v441
        %459 = vmatprep.subr.mxu0 0.0
        %460 = vmatpush1.msra.mxu0 %v442
        %461 = vmatprep.subr.mxu0 0.0
        %462 = vmatpush1.msra.mxu0 %v443
        %463 = vmatprep.subr.mxu0 0.0
        %464 = vmatpush1.msra.mxu0 0.0
        %465 = vmatprep.subr.mxu0 0.0
        %466 = vmatpush1.msra.mxu0 0.0
        %467 = vmatprep.subr.mxu0 0.0
        %468 = vmatpush1.msra.mxu0 0.0
        %469 = vmatprep.subr.mxu0 0.0
        %470 = vmatpush1.msra.mxu0 0.0
        %471 = vmatprep.subr.mxu0 0.0
        %472 = vmatpush1.msra.mxu0 0.0
        %473 = vmatprep.subr.mxu0 0.0
        %474 = vmatpush1.msra.mxu0 0.0
        %475 = vmatprep.subr.mxu0 0.0
        %476 = vmatpush1.msra.mxu0 0.0
        %477 = vmatprep.subr.mxu0 0.0
        %478 = vmatpush1.msra.mxu0 0.0
        %479 = vmatprep.subr.mxu0 0.0
        %480 = vmatpush1.msra.mxu0 0.0
        %481 = vmatprep.subr.mxu0 0.0
        %482 = vmatpush1.msra.mxu0 0.0
        %483 = vmatprep.subr.mxu0 0.0
        %484 = vmatpush1.msra.mxu0 0.0
        %485 = vmatprep.subr.mxu0 0.0
        %486 = vmatpush1.msra.mxu0 0.0
        %487 = vmatprep.subr.mxu0 0.0
        %488 = vmatpush1.msra.mxu0 0.0
        %489 = vmatprep.subr.mxu0 0.0
        %490 = vmatpush1.msra.mxu0 0.0
        %491 = vmatprep.subr.mxu0 0.0
        %492 = vmatpush1.msra.mxu0 0.0
        %493 = vmatprep.subr.mxu0 0.0
        %494 = vmatpush1.msra.mxu0 0.0
        %495 = vmatprep.subr.mxu0 0.0
        %496 = vmatpush1.msra.mxu0 0.0
        %497 = vmatprep.subr.mxu0 0.0
        %498 = vmatpush1.msra.mxu0 0.0
        %499 = vmatprep.subr.mxu0 0.0
        %500 = vmatpush1.msra.mxu0 0.0
        %501 = vmatprep.subr.mxu0 0.0
        %502 = vmatpush1.msra.mxu0 0.0
        %503 = vmatprep.subr.mxu0 0.0
        %504 = vmatpush1.msra.mxu0 0.0
        %505 = vmatprep.subr.mxu0 0.0
        %506 = vmatpush1.msra.mxu0 0.0
        %507 = vmatprep.subr.mxu0 0.0
        %508 = vmatpush1.msra.mxu0 0.0
        %509 = vmatprep.subr.mxu0 0.0
        %510 = vmatpush1.msra.mxu0 0.0
        %511 = vmatprep.subr.mxu0 0.0
        %512 = vmatpush1.msra.mxu0 0.0
        %513 = vmatprep.subr.mxu0 0.0
        %514 = vmatpush1.msra.mxu0 0.0
        %515 = vmatprep.subr.mxu0 0.0
        %516 = vmatpush1.msra.mxu0 0.0
        %517 = vmatprep.subr.mxu0 0.0
        %518 = vmatpush1.msra.mxu0 0.0
        %519 = vmatprep.mubr.f32.mxu0 0.0
        %520 = vmatmul.mubr.f32.gmra.mrb[0].mxu0 %v453
        %v521 = vpop.f32.mrb[0].mxu0
        %v522 = vadd.f32 %v449, %v521
        %v523 = vpop.f32.mrb[0].mxu0
        %524 = vdwg.mxu0
        %v525 = vxor.u32 %v522, 2147483648
        %v526 = vmul.f32 %v525, 1.442695
        %v527 = vpow.pop %v526
        %v528 = vadd.f32 %v527, 1.0
        %v529 = vrcp.pop %v528
        %v530 = vmul.f32 1.0, %v529
        %v531 = vld [vmem:[%s4] sm:$0xff]
        %v532 = vld [vmem:[%s4 + $0x8] sm:$0xff]
        %v533 = vld [vmem:[%s4 + $0x10] sm:$0xff]
        %v534 = vld [vmem:[%s4 + $0x18] sm:$0xff]
        %v535 = vld [vmem:[%s4 + $0x20] sm:$0xff]
        %v536 = vld [vmem:[%s4 + $0x28] sm:$0xff]
        %v537 = vld [vmem:[%s4 + $0x30] sm:$0xff]
        %v538 = vld [vmem:[%s4 + $0x38] sm:$0xff]
        %v539 = vld [vmem:[%s5] sm:$0x1]
        %v541 = vlaneseq
        %v542 = vshrl.u32 %v541, 7
        %v543 = vsub.s32 0, %v542
        %v544 = vrot.slane %v539, %v543
        %vm546 = vcmask 523264
        %v548 = vsel %vm546, %v530, 0
        %550 = vmatprep.subr.mxu0 0.0
        %551 = vmatpush1.msra.mxu0 %v531
        %552 = vmatprep.subr.mxu0 0.0
        %553 = vmatpush1.msra.mxu0 %v532
        %554 = vmatprep.subr.mxu0 0.0
        %555 = vmatpush1.msra.mxu0 %v533
        %556 = vmatprep.subr.mxu0 0.0
        %557 = vmatpush1.msra.mxu0 %v534
        %558 = vmatprep.subr.mxu0 0.0
        %559 = vmatpush1.msra.mxu0 %v535
        %560 = vmatprep.subr.mxu0 0.0
        %561 = vmatpush1.msra.mxu0 %v536
        %562 = vmatprep.subr.mxu0 0.0
        %563 = vmatpush1.msra.mxu0 %v537
        %564 = vmatprep.subr.mxu0 0.0
        %565 = vmatpush1.msra.mxu0 %v538
        %566 = vmatprep.subr.mxu0 0.0
        %567 = vmatpush1.msra.mxu0 0.0
        %568 = vmatprep.subr.mxu0 0.0
        %569 = vmatpush1.msra.mxu0 0.0
        %570 = vmatprep.subr.mxu0 0.0
        %571 = vmatpush1.msra.mxu0 0.0
        %572 = vmatprep.subr.mxu0 0.0
        %573 = vmatpush1.msra.mxu0 0.0
        %574 = vmatprep.subr.mxu0 0.0
        %575 = vmatpush1.msra.mxu0 0.0
        %576 = vmatprep.subr.mxu0 0.0
        %577 = vmatpush1.msra.mxu0 0.0
        %578 = vmatprep.subr.mxu0 0.0
        %579 = vmatpush1.msra.mxu0 0.0
        %580 = vmatprep.subr.mxu0 0.0
        %581 = vmatpush1.msra.mxu0 0.0
        %582 = vmatprep.subr.mxu0 0.0
        %583 = vmatpush1.msra.mxu0 0.0
        %584 = vmatprep.subr.mxu0 0.0
        %585 = vmatpush1.msra.mxu0 0.0
        %586 = vmatprep.subr.mxu0 0.0
        %587 = vmatpush1.msra.mxu0 0.0
        %588 = vmatprep.subr.mxu0 0.0
        %589 = vmatpush1.msra.mxu0 0.0
        %590 = vmatprep.subr.mxu0 0.0
        %591 = vmatpush1.msra.mxu0 0.0
        %592 = vmatprep.subr.mxu0 0.0
        %593 = vmatpush1.msra.mxu0 0.0
        %594 = vmatprep.subr.mxu0 0.0
        %595 = vmatpush1.msra.mxu0 0.0
        %596 = vmatprep.subr.mxu0 0.0
        %597 = vmatpush1.msra.mxu0 0.0
        %598 = vmatprep.subr.mxu0 0.0
        %599 = vmatpush1.msra.mxu0 0.0
        %600 = vmatprep.subr.mxu0 0.0
        %601 = vmatpush1.msra.mxu0 0.0
        %602 = vmatprep.subr.mxu0 0.0
        %603 = vmatpush1.msra.mxu0 0.0
        %604 = vmatprep.subr.mxu0 0.0
        %605 = vmatpush1.msra.mxu0 0.0
        %606 = vmatprep.subr.mxu0 0.0
        %607 = vmatpush1.msra.mxu0 0.0
        %608 = vmatprep.subr.mxu0 0.0
        %609 = vmatpush1.msra.mxu0 0.0
        %610 = vmatprep.subr.mxu0 0.0
        %611 = vmatpush1.msra.mxu0 0.0
        %612 = vmatprep.subr.mxu0 0.0
        %613 = vmatpush1.msra.mxu0 0.0
        %614 = vmatprep.mubr.f32.mxu0 0.0
        %615 = vmatmul.mubr.f32.gmra.mrb[0].mxu0 %v548
        %v616 = vpop.f32.mrb[0].mxu0
        %v617 = vadd.f32 %v544, %v616
        %v618 = vpop.f32.mrb[0].mxu0
        %619 = vdwg.mxu0
        %v620 = vxor.u32 %v617, 2147483648
        %v621 = vmul.f32 %v620, 1.442695
        %v622 = vpow.pop %v621
        %v623 = vadd.f32 %v622, 1.0
        %v624 = vrcp.pop %v623
        %v625 = vmul.f32 1.0, %v624
        %v626 = vld [vmem:[%s434] sm:$0xff]
        %v627 = vld [vmem:[#allocation2] sm:$0x7]
        %v628 = vld [vmem:[#allocation5] sm:$0x1]
        %630 = vset.pattern.permute.xlu0 0
        %631 = vperm.xlu0 %630, %v626
        %v632 = vpop.permute.xlu0 %631
        %v634 = vlaneseq
        %v635 = vshrl.u32 %v634, 7
        %v636 = vsub.s32 0, %v635
        %v637 = vrot.slane %v627, %v636
        %v638 = vmul.f32 %v632, %v637
        %v640 = vlaneseq
        %v641 = vshrl.u32 %v640, 7
        %v642 = vsub.s32 0, %v641
        %v643 = vrot.slane %v628, %v642
        %v645 = vadd.f32 %v643, %v638
        %646 = vset.pattern.permute.xlu0 1
        %647 = vperm.xlu0 %646, %v626
        %v648 = vpop.permute.xlu0 %647
        %v650 = vlaneseq
        %v651 = vshrl.u32 %v650, 7
        %v652 = vsub.s32 1, %v651
        %v653 = vrot.slane %v627, %v652
        %v654 = vmul.f32 %v648, %v653
        %v655 = vadd.f32 %v645, %v654
        %656 = vset.pattern.permute.xlu0 2
        %657 = vperm.xlu0 %656, %v626
        %v658 = vpop.permute.xlu0 %657
        %v660 = vlaneseq
        %v661 = vshrl.u32 %v660, 7
        %v662 = vsub.s32 2, %v661
        %v663 = vrot.slane %v627, %v662
        %v664 = vmul.f32 %v658, %v663
        %v665 = vadd.f32 %v655, %v664
        %v666 = vxor.u32 %v665, 2147483648
        %v667 = vmul.f32 %v666, 1.442695
        %v668 = vpow.pop %v667
        %v669 = vadd.f32 %v668, 1.0
        %v670 = vrcp.pop %v669
        %v671 = vmul.f32 1.0, %v670
        %v672 = vld [vmem:[%s8] sm:$0xff]
        %v673 = vld [vmem:[%s8 + $0x8] sm:$0xff]
        %v674 = vld [vmem:[%s8 + $0x10] sm:$0xff]
        %v675 = vld [vmem:[%s8 + $0x18] sm:$0xff]
        %v676 = vld [vmem:[%s8 + $0x20] sm:$0xff]
        %v677 = vld [vmem:[%s8 + $0x28] sm:$0xff]
        %v678 = vld [vmem:[%s8 + $0x30] sm:$0xff]
        %v679 = vld [vmem:[%s8 + $0x38] sm:$0xff]
        %v680 = vld [vmem:[#allocation7] sm:$0xff]
        %v681 = vld [vmem:[#allocation7 + $0x8] sm:$0xff]
        %v682 = vld [vmem:[#allocation7 + $0x10] sm:$0xff]
        %v683 = vld [vmem:[#allocation7 + $0x18] sm:$0xff]
        %v685 = vsel %vm451, %v671, 0
        %687 = vmatprep.subr.mxu0 0.0
        %688 = vmatpush1.msra.mxu0 %v680
        %689 = vmatprep.subr.mxu0 0.0
        %690 = vmatpush1.msra.mxu0 %v681
        %691 = vmatprep.subr.mxu0 0.0
        %692 = vmatpush1.msra.mxu0 %v682
        %693 = vmatprep.subr.mxu0 0.0
        %694 = vmatpush1.msra.mxu0 %v683
        %695 = vmatprep.subr.mxu0 0.0
        %696 = vmatpush1.msra.mxu0 0.0
        %697 = vmatprep.subr.mxu0 0.0
        %698 = vmatpush1.msra.mxu0 0.0
        %699 = vmatprep.subr.mxu0 0.0
        %700 = vmatpush1.msra.mxu0 0.0
        %701 = vmatprep.subr.mxu0 0.0
        %702 = vmatpush1.msra.mxu0 0.0
        %703 = vmatprep.subr.mxu0 0.0
        %704 = vmatpush1.msra.mxu0 0.0
        %705 = vmatprep.subr.mxu0 0.0
        %706 = vmatpush1.msra.mxu0 0.0
        %707 = vmatprep.subr.mxu0 0.0
        %708 = vmatpush1.msra.mxu0 0.0
        %709 = vmatprep.subr.mxu0 0.0
        %710 = vmatpush1.msra.mxu0 0.0
        %711 = vmatprep.subr.mxu0 0.0
        %712 = vmatpush1.msra.mxu0 0.0
        %713 = vmatprep.subr.mxu0 0.0
        %714 = vmatpush1.msra.mxu0 0.0
        %715 = vmatprep.subr.mxu0 0.0
        %716 = vmatpush1.msra.mxu0 0.0
        %717 = vmatprep.subr.mxu0 0.0
        %718 = vmatpush1.msra.mxu0 0.0
        %719 = vmatprep.subr.mxu0 0.0
        %720 = vmatpush1.msra.mxu0 0.0
        %721 = vmatprep.subr.mxu0 0.0
        %722 = vmatpush1.msra.mxu0 0.0
        %723 = vmatprep.subr.mxu0 0.0
        %724 = vmatpush1.msra.mxu0 0.0
        %725 = vmatprep.subr.mxu0 0.0
        %726 = vmatpush1.msra.mxu0 0.0
        %727 = vmatprep.subr.mxu0 0.0
        %728 = vmatpush1.msra.mxu0 0.0
        %729 = vmatprep.subr.mxu0 0.0
        %730 = vmatpush1.msra.mxu0 0.0
        %731 = vmatprep.subr.mxu0 0.0
        %732 = vmatpush1.msra.mxu0 0.0
        %733 = vmatprep.subr.mxu0 0.0
        %734 = vmatpush1.msra.mxu0 0.0
        %735 = vmatprep.subr.mxu0 0.0
        %736 = vmatpush1.msra.mxu0 0.0
        %737 = vmatprep.subr.mxu0 0.0
        %738 = vmatpush1.msra.mxu0 0.0
        %739 = vmatprep.subr.mxu0 0.0
        %740 = vmatpush1.msra.mxu0 0.0
        %741 = vmatprep.subr.mxu0 0.0
        %742 = vmatpush1.msra.mxu0 0.0
        %743 = vmatprep.subr.mxu0 0.0
        %744 = vmatpush1.msra.mxu0 0.0
        %745 = vmatprep.subr.mxu0 0.0
        %746 = vmatpush1.msra.mxu0 0.0
        %747 = vmatprep.subr.mxu0 0.0
        %748 = vmatpush1.msra.mxu0 0.0
        %749 = vmatprep.subr.mxu0 0.0
        %750 = vmatpush1.msra.mxu0 0.0
        %751 = vmatprep.mubr.f32.mxu0 0.0
        %752 = vmatmul.mubr.f32.gmra.mrb[0].mxu0 %v685
        %v753 = vpop.f32.mrb[0].mxu0
        %v754 = vadd.f32 0.0, %v753
        %v755 = vpop.f32.mrb[0].mxu0
        %756 = vdwg.mxu0
        %v758 = vsel %vm546, %v625, 0
        %760 = vmatprep.subr.mxu0 0.0
        %761 = vmatpush1.msra.mxu0 %v672
        %762 = vmatprep.subr.mxu0 0.0
        %763 = vmatpush1.msra.mxu0 %v673
        %764 = vmatprep.subr.mxu0 0.0
        %765 = vmatpush1.msra.mxu0 %v674
        %766 = vmatprep.subr.mxu0 0.0
        %767 = vmatpush1.msra.mxu0 %v675
        %768 = vmatprep.subr.mxu0 0.0
        %769 = vmatpush1.msra.mxu0 %v676
        %770 = vmatprep.subr.mxu0 0.0
        %771 = vmatpush1.msra.mxu0 %v677
        %772 = vmatprep.subr.mxu0 0.0
        %773 = vmatpush1.msra.mxu0 %v678
        %774 = vmatprep.subr.mxu0 0.0
        %775 = vmatpush1.msra.mxu0 %v679
        %776 = vmatprep.subr.mxu0 0.0
        %777 = vmatpush1.msra.mxu0 0.0
        %778 = vmatprep.subr.mxu0 0.0
        %779 = vmatpush1.msra.mxu0 0.0
        %780 = vmatprep.subr.mxu0 0.0
        %781 = vmatpush1.msra.mxu0 0.0
        %782 = vmatprep.subr.mxu0 0.0
        %783 = vmatpush1.msra.mxu0 0.0
        %784 = vmatprep.subr.mxu0 0.0
        %785 = vmatpush1.msra.mxu0 0.0
        %786 = vmatprep.subr.mxu0 0.0
        %787 = vmatpush1.msra.mxu0 0.0
        %788 = vmatprep.subr.mxu0 0.0
        %789 = vmatpush1.msra.mxu0 0.0
        %790 = vmatprep.subr.mxu0 0.0
        %791 = vmatpush1.msra.mxu0 0.0
        %792 = vmatprep.subr.mxu0 0.0
        %793 = vmatpush1.msra.mxu0 0.0
        %794 = vmatprep.subr.mxu0 0.0
        %795 = vmatpush1.msra.mxu0 0.0
        %796 = vmatprep.subr.mxu0 0.0
        %797 = vmatpush1.msra.mxu0 0.0
        %798 = vmatprep.subr.mxu0 0.0
        %799 = vmatpush1.msra.mxu0 0.0
        %800 = vmatprep.subr.mxu0 0.0
        %801 = vmatpush1.msra.mxu0 0.0
        %802 = vmatprep.subr.mxu0 0.0
        %803 = vmatpush1.msra.mxu0 0.0
        %804 = vmatprep.subr.mxu0 0.0
        %805 = vmatpush1.msra.mxu0 0.0
        %806 = vmatprep.subr.mxu0 0.0
        %807 = vmatpush1.msra.mxu0 0.0
        %808 = vmatprep.subr.mxu0 0.0
        %809 = vmatpush1.msra.mxu0 0.0
        %810 = vmatprep.subr.mxu0 0.0
        %811 = vmatpush1.msra.mxu0 0.0
        %812 = vmatprep.subr.mxu0 0.0
        %813 = vmatpush1.msra.mxu0 0.0
        %814 = vmatprep.subr.mxu0 0.0
        %815 = vmatpush1.msra.mxu0 0.0
        %816 = vmatprep.subr.mxu0 0.0
        %817 = vmatpush1.msra.mxu0 0.0
        %818 = vmatprep.subr.mxu0 0.0
        %819 = vmatpush1.msra.mxu0 0.0
        %820 = vmatprep.subr.mxu0 0.0
        %821 = vmatpush1.msra.mxu0 0.0
        %822 = vmatprep.subr.mxu0 0.0
        %823 = vmatpush1.msra.mxu0 0.0
        %824 = vmatprep.mubr.f32.mxu0 0.0
        %825 = vmatmul.mubr.f32.gmra.mrb[0].mxu0 %v758
        %v826 = vpop.f32.mrb[0].mxu0
        %v827 = vadd.f32 %v754, %v826
        %v828 = vpop.f32.mrb[0].mxu0
        %829 = vdwg.mxu0
        %v830 = vld [vmem:[%s10] sm:$0x1]
        %v832 = vlaneseq
        %v833 = vshrl.u32 %v832, 7
        %v834 = vsub.s32 0, %v833
        %v835 = vrot.slane %v830, %v834
        %v837 = vadd.f32 %v827, %v835
        %838 = vst.msk [vmem:[%s430] sm:$0xff] %vm451, %v837
        %s839 = sand.u32 %s276, 1
        %s840 = scalar_lea.sflag [#allocation4], %s839
        %s841 = sand.u32 %s276, 1
        %s842 = smul.addr %s841, 8
        %s843 = scalar_lea.vmem [#allocation8], %s842
        // Predicated region
        $region77: #{tpu_custom_call.1} parent=63 // pred_check
          %p844 = pneg %p286
        $region78: #{tpu_custom_call.1} parent=63 // pred_check_branch
          %846 = sbr.rel (%p844) target = $region80
        $region79: #{tpu_custom_call.1} parent=63 // pred_region
          %s848 = ssub.s32 128, 128
          %849 = vsyncadd %s840, %s848
          %s850 = smul.addr %s27, 128
          %s851 = scalar_lea.hbm %s11, %s850
          %s853 = sshll.u32 %s843, 4
          %s854 = int_to_ptr.vmem [resolvable:$true] %s853
          %856 = dma.vmem_to_hbm [thread:$0]  %s854, 128, %s851, %s840
        $region80: #{tpu_custom_call.1} parent=63 // pred_fallthru
          _
      $region64: #{tpu_custom_call.1} parent=5 // pred_fallthru
        _
      %p857 = scmp.le.s32.totalorder 2, %s22
      // Predicated region
      $region81: #{tpu_custom_call.1} parent=5 // pred_check
        %p858 = pneg %p857
      $region82: #{tpu_custom_call.1} parent=5 // pred_check_branch
        %860 = sbr.rel (%p858) target = $region84
      $region83: #{tpu_custom_call.1} parent=5 // pred_region
        %s861 = ssub.s32 %s22, 2
        // Predicated region
        $region85: #{tpu_custom_call.1} parent=83 // pred_check
          %p862 = pneg %p292
        $region86: #{tpu_custom_call.1} parent=83 // pred_check_branch
          %864 = sbr.rel (%p862) target = $region88
        $region87: #{tpu_custom_call.1} parent=83 // pred_region
          %s865 = sand.u32 %s277, 1
          %s866 = scalar_lea.sflag [#allocation4], %s865
          %s867 = sand.u32 %s277, 1
          %s868 = smul.addr %s867, 8
          %s869 = scalar_lea.vmem [#allocation8], %s868
          %870 = dma.done %s866, 128
        $region88: #{tpu_custom_call.1} parent=83 // pred_fallthru
          _
      $region84: #{tpu_custom_call.1} parent=5 // pred_fallthru
        _
    $region6: #{tpu_custom_call.1} parent=1 // loop_footer
      %s26 = sadd.s32 1, %s22
    $region7: #{tpu_custom_call.1} parent=1 // loop_footer_branch
      %21 = sbr.rel target = $region3
    $region8: #{tpu_custom_call.1} parent=1 // loop_exit
      _
    %871 = vsyncpa [#allocation3], 1
    %s872 = scalar_lea.sflag [#allocation3], 1
    %873 = vsyncpa %s872, 1
    %874 = vsyncpa [#allocation6], 1
    %875 = vsyncpa [#allocation4], 1
    %s876 = scalar_lea.sflag [#allocation4], 1
    %877 = vsyncpa %s876, 1

</llo_original>
